<compile_context>
chip_gen: v7x
topology: tpu7x:2x2x1
jax: 0.10.0
libtpu: 0.0.40
codegen_flags: <defaults>
</compile_context>

<pallas_src>
import functools
import math

import jax
import jax.numpy as jnp
from jax.experimental import pallas as pl
from jax.experimental.pallas import tpu as pltpu


def _round_up(x: int, m: int) -> int:
    return ((x + m - 1) // m) * m


def _split_axis(size: int, align: int, cap: int):
    """Pad `size` to a multiple of `align`, split into equal tiles <= cap.

    Returns (padded_size, tile) with tile * n == padded_size.
    """
    size_a = _round_up(size, align)
    cap = max(align, (cap // align) * align)
    n = -(-size_a // cap)
    tile = _round_up(-(-size_a // n), align)
    return tile * n, tile


def _largest_divisor_tile(padded: int, cap: int, align: int = 128) -> int:
    """Largest multiple-of-`align` divisor of `padded` that is <= cap."""
    q = padded // align
    cap_q = max(1, cap // align)
    best = 1
    d = 1
    while d * d <= q:
        if q % d == 0:
            for c in (d, q // d):
                if c <= cap_q and c > best:
                    best = c
        d += 1
    return best * align


def _choose_tiles(B, Fp, Op, x_bytes, w_bytes, o_bytes,
                  tm_cap, tn_cap, tk_cap, vmem_budget):
    """Pick (Bp, tm, tn, tk, footprint) under a VMEM budget.

    tn / tk must divide the pre-padded weight dims exactly (the weight is never
    re-padded per call); tm prefers to cover the whole batch so the weight
    streams from HBM exactly once.
    """
    while True:
        Bp, tm = _split_axis(B, 8, tm_cap)
        tn = _largest_divisor_tile(Op, tn_cap)
        tk = _largest_divisor_tile(Fp, tk_cap)
        foot = (2 * tm * tk * x_bytes      # double-buffered x tile
                + 2 * tk * tn * w_bytes    # double-buffered weight tile
                + 2 * tm * tn * o_bytes    # double-buffered output tile
                + tm * tn * 4              # f32 accumulator
                + 4 * tn * 4)              # scale + bias tiles
        if foot <= vmem_budget or (tm_cap <= 128 and tn_cap <= 256 and tk_cap <= 512):
            return Bp, tm, tn, tk, foot
        # Shrink the largest cap first.
        if tk_cap >= max(tm_cap, tn_cap) and tk_cap > 512:
            tk_cap //= 2
        elif tn_cap >= tm_cap and tn_cap > 256:
            tn_cap //= 2
        else:
            tm_cap = max(128, tm_cap // 2)


# ---------------------------------------------------------------------------
# Kernels
# ---------------------------------------------------------------------------

def _linear_kernel(x_ref, w_ref, s_ref, b_ref, o_ref, acc_ref):
    """General path: grid axis 2 walks K; f32 accumulator resident across K."""
    k = pl.program_id(2)

    @pl.when(k == 0)
    def _():
        acc_ref[...] = jnp.zeros_like(acc_ref)

    x = x_ref[...]
    w = w_ref[...]
    if w.dtype != x.dtype:          # e.g. int8 weights -> compute dtype (trace-time branch)
        w = w.astype(x.dtype)
    acc_ref[...] += jnp.dot(x, w, preferred_element_type=jnp.float32)

    # Epilogue: per-channel scale (dequant) + bias exactly once, lane-dense store.
    @pl.when(k == pl.num_programs(2) - 1)
    def _():
        o_ref[...] = (acc_ref[...] * s_ref[...] + b_ref[...]).astype(o_ref.dtype)


def _linear_kernel_single_k(x_ref, w_ref, s_ref, b_ref, o_ref):
    """K fits one tile: no scratch accumulator, no zero-init, no '+=' round trip."""
    x = x_ref[...]
    w = w_ref[...]
    if w.dtype != x.dtype:
        w = w.astype(x.dtype)
    acc = jnp.dot(x, w, preferred_element_type=jnp.float32)
    o_ref[...] = (acc * s_ref[...] + b_ref[...]).astype(o_ref.dtype)


# ---------------------------------------------------------------------------
# One-time parameter preparation (do at load time, NOT per forward call)
# ---------------------------------------------------------------------------

def prepare_classification_adapter_params(weight, bias, *, weight_layout="OF",
                                          param_dtype=jnp.bfloat16,
                                          quantize_int8=False):
    """Transpose / narrow / pad nn.Linear parameters once.

    weight: [O, F] (PyTorch layout, weight_layout="OF") or [F, O] ("FO").
    Returns (weight_p [Fp, Op], scale_p [1, Op] f32, bias_p [1, Op] f32) with
    Fp, Op rounded up to multiples of 128.
    """
    w = jnp.asarray(weight)
    if weight_layout == "OF":
        w = w.T
    elif weight_layout != "FO":
        raise ValueError(f"unknown weight_layout: {weight_layout!r}")
    F, O = w.shape
    Fp, Op = _round_up(F, 128), _round_up(O, 128)
    w = w.astype(jnp.float32)

    if quantize_int8:
        # Per-output-channel symmetric int8 quantization (v5e/v6e MXU-native).
        amax = jnp.max(jnp.abs(w), axis=0, keepdims=True)            # [1, O]
        scale = jnp.maximum(amax / 127.0, 1e-8).astype(jnp.float32)
        w_store = jnp.clip(jnp.round(w / scale), -127, 127).astype(jnp.int8)
    else:
        scale = jnp.ones((1, O), jnp.float32)
        w_store = w.astype(param_dtype)

    weight_p = jnp.pad(w_store, ((0, Fp - F), (0, Op - O)))
    scale_p = jnp.pad(scale, ((0, 0), (0, Op - O)))
    bias_p = jnp.pad(jnp.asarray(bias, jnp.float32).reshape(1, O),
                     ((0, 0), (0, Op - O)))
    return weight_p, scale_p, bias_p


# ---------------------------------------------------------------------------
# Forward
# ---------------------------------------------------------------------------

@functools.partial(
    jax.jit,
    static_argnames=("out_dim", "compute_dtype", "tm_cap", "tn_cap", "tk_cap",
                     "vmem_budget_bytes"),
)
def classification_adapter_forward(x, weight_p, scale_p, bias_p, *,
                                   out_dim=None,
                                   compute_dtype=jnp.bfloat16,
                                   tm_cap=1024, tn_cap=1024, tk_cap=2048,
                                   vmem_budget_bytes=28 * 1024 * 1024):
    """y = x @ W + b with prepared params (see prepare_classification_adapter_params).

    x:        [..., F]            (leading dims flattened like nn.Linear)
    weight_p: [Fp, Op]            pre-transposed / pre-padded (bf16, f32 or int8)
    scale_p:  [1, Op] f32         per-output-channel scale (ones if not quantized)
    bias_p:   [1, Op] f32
    returns   [..., out_dim] in x.dtype
    """
    Fp, Op = weight_p.shape
    assert scale_p.shape == (1, Op) and bias_p.shape == (1, Op)
    out_dim = Op if out_dim is None else out_dim
    assert out_dim <= Op

    orig_dtype = x.dtype
    lead_shape = x.shape[:-1]
    F_in = x.shape[-1]
    assert F_in <= Fp, f"x features {F_in} exceed prepared weight rows {Fp}"
    B = int(math.prod(lead_shape)) if lead_shape else 1
    x2 = x.reshape(B, F_in)
    if compute_dtype is not None and x2.dtype != jnp.dtype(compute_dtype):
        x2 = x2.astype(compute_dtype)          # bf16 stream, f32 accumulation

    x_bytes = x2.dtype.itemsize
    w_bytes = weight_p.dtype.itemsize
    o_bytes = jnp.dtype(orig_dtype).itemsize

    Bp, tm, tn, tk, foot = _choose_tiles(B, Fp, Op, x_bytes, w_bytes, o_bytes,
                                         tm_cap, tn_cap, tk_cap,
                                         vmem_budget_bytes)
    n_i, n_j, n_k = Bp // tm, Op // tn, Fp // tk

    # v7x megacore: guarantee >= 2 blocks along a 'parallel' axis when possible.
    # Prefer splitting N (the weight column panel is still streamed once).
    if n_i == 1 and n_j == 1:
        if tn >= 256 and tn % 256 == 0:
            tn //= 2
            n_j = 2
        elif tm >= 16:
            tm = _round_up(-(-Bp // 2), 8)
            Bp = 2 * tm
            n_i = 2

    # Only x (the small operand) is padded per call; the weight is pre-padded.
    xp = x2
    if Bp != B or Fp != F_in:
        xp = jnp.pad(x2, ((0, Bp - B), (0, Fp - F_in)))

    vmem_limit = int(min(48 * 1024 * 1024,
                         max(32 * 1024 * 1024, foot + foot // 2)))
    cost = pl.CostEstimate(
        flops=2 * Bp * Fp * Op,
        transcendentals=0,
        bytes_accessed=(Bp * Fp * x_bytes + Fp * Op * w_bytes
                        + 2 * Op * 4 + Bp * Op * o_bytes),
    )

    if n_k == 1:
        out_padded = pl.pallas_call(
            _linear_kernel_single_k,
            out_shape=jax.ShapeDtypeStruct((Bp, Op), orig_dtype),
            grid_spec=pltpu.PrefetchScalarGridSpec(
                num_scalar_prefetch=0,
                grid=(n_i, n_j),
                in_specs=[
                    pl.BlockSpec((tm, Fp), lambda i, j: (i, 0)),   # x panel
                    pl.BlockSpec((Fp, tn), lambda i, j: (0, j)),   # weight panel
                    pl.BlockSpec((1, tn), lambda i, j: (0, j)),    # scale
                    pl.BlockSpec((1, tn), lambda i, j: (0, j)),    # bias
                ],
                out_specs=pl.BlockSpec((tm, tn), lambda i, j: (i, j)),
            ),
            compiler_params=pltpu.CompilerParams(
                dimension_semantics=("parallel", "parallel"),
                vmem_limit_bytes=vmem_limit,
            ),
            cost_estimate=cost,
        )(xp, weight_p, scale_p, bias_p)
    else:
        out_padded = pl.pallas_call(
            _linear_kernel,
            out_shape=jax.ShapeDtypeStruct((Bp, Op), orig_dtype),
            grid_spec=pltpu.PrefetchScalarGridSpec(
                num_scalar_prefetch=0,
                grid=(n_i, n_j, n_k),                 # K innermost, 'arbitrary'
                in_specs=[
                    pl.BlockSpec((tm, tk), lambda i, j, k: (i, k)),   # x tile
                    pl.BlockSpec((tk, tn), lambda i, j, k: (k, j)),   # weight tile
                    pl.BlockSpec((1, tn), lambda i, j, k: (0, j)),    # scale
                    pl.BlockSpec((1, tn), lambda i, j, k: (0, j)),    # bias
                ],
                out_specs=pl.BlockSpec((tm, tn), lambda i, j, k: (i, j)),
                scratch_shapes=[pltpu.VMEM((tm, tn), jnp.float32)],
            ),
            compiler_params=pltpu.CompilerParams(
                dimension_semantics=("parallel", "parallel", "arbitrary"),
                vmem_limit_bytes=vmem_limit,
            ),
            cost_estimate=cost,
        )(xp, weight_p, scale_p, bias_p)

    out = out_padded[:B, :out_dim]
    return out.reshape(*lead_shape, out_dim)


# ---------------------------------------------------------------------------
# Module-equivalent wrapper
# ---------------------------------------------------------------------------

class ClassificationAdapter:
    """Pallas-TPU counterpart of the PyTorch ClassificationAdapter (nn.Linear head)."""

    def __init__(self, key, feat_dim, output_dim, *,
                 param_dtype=jnp.bfloat16, compute_dtype=jnp.bfloat16,
                 quantize_int8=False):
        kw, kb = jax.random.split(key)
        bound = 1.0 / math.sqrt(feat_dim)        # nn.Linear default init
        self.weight_of = jax.random.uniform(kw, (output_dim, feat_dim),
                                            jnp.float32, -bound, bound)
        self.bias = jax.random.uniform(kb, (output_dim,),
                                       jnp.float32, -bound, bound)
        self.output_dim = output_dim
        self.compute_dtype = compute_dtype
        # One-time prep: transpose, narrow/quantize, pad — never redone per call.
        self.weight_p, self.scale_p, self.bias_p = \
            prepare_classification_adapter_params(
                self.weight_of, self.bias, weight_layout="OF",
                param_dtype=param_dtype, quantize_int8=quantize_int8)

    def __call__(self, x):
        return classification_adapter_forward(
            x, self.weight_p, self.scale_p, self.bias_p,
            out_dim=self.output_dim, compute_dtype=self.compute_dtype)


if __name__ == "__main__":
    key = jax.random.PRNGKey(0)
    k_x, k_p, k_x2, k_p2 = jax.random.split(key, 4)

    # --- small shapes consistent with a classification head ---
    batch, feat_dim, output_dim = 8, 32, 16
    x = jax.random.normal(k_x, (batch, feat_dim), dtype=jnp.float32)

    # 1) Exact f32 path (no dtype narrowing): must match plain JAX linear tightly.
    head32 = ClassificationAdapter(k_p, feat_dim, output_dim,
                                   param_dtype=jnp.float32, compute_dtype=None)
    out = jax.block_until_ready(head32(x))
    ref = x @ head32.weight_of.T + head32.bias[None, :]
    assert out.shape == (batch, output_dim)
    assert out.dtype == x.dtype
    assert jnp.allclose(out, ref, atol=1e-5, rtol=1e-5), "f32 path mismatch"

    # 2) Default bf16-compute path (same parameters, f32 accumulation).
    head_bf = ClassificationAdapter(k_p, feat_dim, output_dim)
    out_bf = jax.block_until_ready(head_bf(x))
    x_bf = x.astype(jnp.bfloat16).astype(jnp.float32)
    w_bf = head_bf.weight_of.astype(jnp.bfloat16).astype(jnp.float32)
    ref_bf = x_bf @ w_bf.T + head_bf.bias[None, :]
    assert jnp.allclose(out_bf, ref_bf, atol=1e-2, rtol=1e-2), "bf16 path mismatch"

    # 3) Larger multi-tile grid + int8-weight path (per-channel scale in epilogue).
    B2, F2, O2 = 384, 1536, 1000
    x2 = jax.random.normal(k_x2, (B2, F2), dtype=jnp.float32)
    head_q = ClassificationAdapter(k_p2, F2, O2, quantize_int8=True)
    out_q = jax.block_until_ready(head_q(x2))
    x2_bf = x2.astype(jnp.bfloat16).astype(jnp.float32)
    w_deq = head_q.weight_p[:F2, :O2].astype(jnp.float32) * head_q.scale_p[:, :O2]
    ref_q = x2_bf @ w_deq + head_q.bias[None, :]
    assert out_q.shape == (B2, O2)
    assert jnp.allclose(out_q, ref_q, atol=2e-2, rtol=2e-2), "int8 path mismatch"

    print("KERNEL_OK")
</pallas_src>

<mosaic_0001>
module attributes {stable_mosaic.version = 11 : i64} {
  func.func @_linear_kernel_single_k(%arg0: i32, %arg1: i32, %arg2: memref<8x128xf32, #tpu.memory_space<vmem>>, %arg3: memref<128x128xf32, #tpu.memory_space<vmem>>, %arg4: memref<1x128xf32, #tpu.memory_space<vmem>>, %arg5: memref<1x128xf32, #tpu.memory_space<vmem>>, %arg6: memref<8x128xf32, #tpu.memory_space<vmem>>) attributes {dimension_semantics = [#tpu.dimension_semantics<parallel>, #tpu.dimension_semantics<parallel>], iteration_bounds = array<i64: 1, 1>, scalar_prefetch = 0 : i64, scratch_operands = 0 : i64, tpu.core_type = #tpu.core_type<tc>, window_params = [{transform_indices = @transform_0, window_bounds = array<i64: 8, 128>}, {transform_indices = @transform_1, window_bounds = array<i64: 128, 128>}, {transform_indices = @transform_2, window_bounds = array<i64: 1, 128>}, {transform_indices = @transform_3, window_bounds = array<i64: 1, 128>}, {transform_indices = @transform_4, window_bounds = array<i64: 8, 128>}]} {
    %c0 = arith.constant 0 : index
    %c0_0 = arith.constant 0 : index
    %0 = vector.load %arg2[%c0, %c0_0] : memref<8x128xf32, #tpu.memory_space<vmem>>, vector<8x128xf32>
    %c0_1 = arith.constant 0 : index
    %c0_2 = arith.constant 0 : index
    %1 = vector.load %arg3[%c0_1, %c0_2] : memref<128x128xf32, #tpu.memory_space<vmem>>, vector<128x128xf32>
    %cst = arith.constant dense<0.000000e+00> : vector<8x128xf32>
    %2 = tpu.matmul %0, %1, %cst {dimension_numbers = #tpu.dot_dimension_numbers<[1], [0], [0], [1], [0, 0, 1, 1], [], []>} : vector<8x128xf32>, vector<128x128xf32>, vector<8x128xf32> -> vector<8x128xf32>
    %c0_3 = arith.constant 0 : index
    %c0_4 = arith.constant 0 : index
    %3 = vector.load %arg4[%c0_3, %c0_4] : memref<1x128xf32, #tpu.memory_space<vmem>>, vector<1x128xf32>
    %4 = vector.broadcast %3 : vector<1x128xf32> to vector<8x128xf32>
    %5 = arith.mulf %2, %4 : vector<8x128xf32>
    %c0_5 = arith.constant 0 : index
    %c0_6 = arith.constant 0 : index
    %6 = vector.load %arg5[%c0_5, %c0_6] : memref<1x128xf32, #tpu.memory_space<vmem>>, vector<1x128xf32>
    %7 = vector.broadcast %6 : vector<1x128xf32> to vector<8x128xf32>
    %8 = arith.addf %5, %7 : vector<8x128xf32>
    %c0_7 = arith.constant 0 : index
    %c0_8 = arith.constant 0 : index
    %9 = vector.load %arg6[%c0_7, %c0_8] : memref<8x128xf32, #tpu.memory_space<vmem>>, vector<8x128xf32>
    tpu.vector_store %arg6[%c0_7, %c0_8], %8 {strides = array<i32>} : memref<8x128xf32, #tpu.memory_space<vmem>>, vector<8x128xf32>,
    return
  }
  func.func @transform_0(%arg0: i32, %arg1: i32) -> (i32, i32) {
    %c0_i32 = arith.constant 0 : i32
    %c0_i32_0 = arith.constant 0 : i32
    return %arg0, %c0_i32 : i32, i32
  }
  func.func @transform_1(%arg0: i32, %arg1: i32) -> (i32, i32) {
    %c0_i32 = arith.constant 0 : i32
    %c0_i32_0 = arith.constant 0 : i32
    return %c0_i32, %arg1 : i32, i32
  }
  func.func @transform_2(%arg0: i32, %arg1: i32) -> (i32, i32) {
    %c0_i32 = arith.constant 0 : i32
    %c0_i32_0 = arith.constant 0 : i32
    return %c0_i32, %arg1 : i32, i32
  }
  func.func @transform_3(%arg0: i32, %arg1: i32) -> (i32, i32) {
    %c0_i32 = arith.constant 0 : i32
    %c0_i32_0 = arith.constant 0 : i32
    return %c0_i32, %arg1 : i32, i32
  }
  func.func @transform_4(%arg0: i32, %arg1: i32) -> (i32, i32) {
    %c0_i32 = arith.constant 0 : i32
    return %arg0, %arg1 : i32, i32
  }
}

</mosaic_0001>

<llo_original>
// kernel: classification_adapter_forward.1
$region0: #{classification_adapter_forward.1}
  #allocation0 [shape = 'u32[]', space=smem, size = 0x4, offset = 0x4, fixed_abs, tag = 'smem constant byte address 0x4 - core index']
  #allocation1 [shape = 'u32[144,128]{1,0:T(1,128)}', space=vmem, size = 0x12000, scoped, tag = 'internal scratch']
  %s0 = inlined_call_operand.vmem [shape: f32[8,128], index: 0, kind: input, shape index: {}]
  %s1 = inlined_call_operand.hbm [shape: f32[128,128], index: 1, kind: input, shape index: {}]
  %s2 = inlined_call_operand.vmem [shape: f32[1,128], index: 2, kind: input, shape index: {}]
  %s3 = inlined_call_operand.vmem [shape: f32[1,128], index: 3, kind: input, shape index: {}]
  %s4 = inlined_call_operand.hbm [shape: f32[8,128], index: 4, kind: output, shape index: {}]
  %s5 = sld [smem:[#allocation0]]
  $region30: #{classification_adapter_forward.1} parent=0
    _
  %s7 = ssub.s32 1, %s5
  %s8 = scalar_select 0, %s7, %s5
  $region1: #{classification_adapter_forward.1} parent=0
    #allocation2 [shape = 'u8[65536]{0}', space=vmem, size = 0x10000, scoped, tag = 'input window, operand 1, single buffered']
    #allocation3 [shape = 's32[1]{0}', space=sflag, size = 0x4, scoped, tag = 'scoped memory for classification_adapter_forward.1']
    #allocation4 [shape = 's32[1]{0}', space=sflag, size = 0x4, scoped, tag = 'scoped memory for classification_adapter_forward.1']
    #allocation5 [shape = 'u8[4096]{0}', space=vmem, size = 0x1000, scoped, tag = 'output window, operand 0, single buffered']
    %9 = vsyncpa [#allocation3], 0
    %10 = vsyncpa [#allocation4], 0
    // Predicated region
    $region2: #{classification_adapter_forward.1} parent=1 // pred_check
      _
    $region3: #{classification_adapter_forward.1} parent=1 // pred_check_branch
      %12 = sbr.rel (0) target = $region5
    $region4: #{classification_adapter_forward.1} parent=1 // pred_region
      _
    $region5: #{classification_adapter_forward.1} parent=1 // pred_fallthru
      _
    // Predicated region
    $region6: #{classification_adapter_forward.1} parent=1 // pred_check
      _
    $region7: #{classification_adapter_forward.1} parent=1 // pred_check_branch
      %14 = sbr.rel (0) target = $region9
    $region8: #{classification_adapter_forward.1} parent=1 // pred_region
      %s16 = ssub.s32 2048, 2048
      %17 = vsyncadd [#allocation3], %s16
      %s18 = sshll.u32 [#allocation2], 4
      %s19 = int_to_ptr.vmem [resolvable:$true] %s18
      %24 = dma.hbm_to_vmem [thread:$0]  %s1, 2048, %s19, [#allocation3], 128, 128, 8
    $region9: #{classification_adapter_forward.1} parent=1 // pred_fallthru
      _
    // Predicated region
    $region10: #{classification_adapter_forward.1} parent=1 // pred_check
      _
    $region11: #{classification_adapter_forward.1} parent=1 // pred_check_branch
      %26 = sbr.rel (0) target = $region13
    $region12: #{classification_adapter_forward.1} parent=1 // pred_region
      _
    $region13: #{classification_adapter_forward.1} parent=1 // pred_fallthru
      _
    // Predicated region
    $region14: #{classification_adapter_forward.1} parent=1 // pred_check
      _
    $region15: #{classification_adapter_forward.1} parent=1 // pred_check_branch
      %28 = sbr.rel (0) target = $region17
    $region16: #{classification_adapter_forward.1} parent=1 // pred_region
      _
    $region17: #{classification_adapter_forward.1} parent=1 // pred_fallthru
      _
    // Predicated region
    $region18: #{classification_adapter_forward.1} parent=1 // pred_check
      _
    $region19: #{classification_adapter_forward.1} parent=1 // pred_check_branch
      %30 = sbr.rel (0) target = $region21
    $region20: #{classification_adapter_forward.1} parent=1 // pred_region
      %31 = dma.done [#allocation3], 2048
    $region21: #{classification_adapter_forward.1} parent=1 // pred_fallthru
      _
    %v32 = vld [vmem:[%s0] sm:$0xff]
    %v33 = vld [vmem:[#allocation2] sm:$0xff]
    %v34 = vld [vmem:[#allocation2 + $0x8] sm:$0xff]
    %v35 = vld [vmem:[#allocation2 + $0x10] sm:$0xff]
    %v36 = vld [vmem:[#allocation2 + $0x18] sm:$0xff]
    %v37 = vld [vmem:[#allocation2 + $0x20] sm:$0xff]
    %v38 = vld [vmem:[#allocation2 + $0x28] sm:$0xff]
    %v39 = vld [vmem:[#allocation2 + $0x30] sm:$0xff]
    %v40 = vld [vmem:[#allocation2 + $0x38] sm:$0xff]
    %v41 = vld [vmem:[#allocation2 + $0x40] sm:$0xff]
    %v42 = vld [vmem:[#allocation2 + $0x48] sm:$0xff]
    %v43 = vld [vmem:[#allocation2 + $0x50] sm:$0xff]
    %v44 = vld [vmem:[#allocation2 + $0x58] sm:$0xff]
    %v45 = vld [vmem:[#allocation2 + $0x60] sm:$0xff]
    %v46 = vld [vmem:[#allocation2 + $0x68] sm:$0xff]
    %v47 = vld [vmem:[#allocation2 + $0x70] sm:$0xff]
    %v48 = vld [vmem:[#allocation2 + $0x78] sm:$0xff]
    %49 = vmatprep.subr.mxu0 0.0
    %50 = vmatpush1.msra.mxu0 %v33
    %51 = vmatprep.subr.mxu0 0.0
    %52 = vmatpush1.msra.mxu0 %v34
    %53 = vmatprep.subr.mxu0 0.0
    %54 = vmatpush1.msra.mxu0 %v35
    %55 = vmatprep.subr.mxu0 0.0
    %56 = vmatpush1.msra.mxu0 %v36
    %57 = vmatprep.subr.mxu0 0.0
    %58 = vmatpush1.msra.mxu0 %v37
    %59 = vmatprep.subr.mxu0 0.0
    %60 = vmatpush1.msra.mxu0 %v38
    %61 = vmatprep.subr.mxu0 0.0
    %62 = vmatpush1.msra.mxu0 %v39
    %63 = vmatprep.subr.mxu0 0.0
    %64 = vmatpush1.msra.mxu0 %v40
    %65 = vmatprep.subr.mxu0 0.0
    %66 = vmatpush1.msra.mxu0 %v41
    %67 = vmatprep.subr.mxu0 0.0
    %68 = vmatpush1.msra.mxu0 %v42
    %69 = vmatprep.subr.mxu0 0.0
    %70 = vmatpush1.msra.mxu0 %v43
    %71 = vmatprep.subr.mxu0 0.0
    %72 = vmatpush1.msra.mxu0 %v44
    %73 = vmatprep.subr.mxu0 0.0
    %74 = vmatpush1.msra.mxu0 %v45
    %75 = vmatprep.subr.mxu0 0.0
    %76 = vmatpush1.msra.mxu0 %v46
    %77 = vmatprep.subr.mxu0 0.0
    %78 = vmatpush1.msra.mxu0 %v47
    %79 = vmatprep.subr.mxu0 0.0
    %80 = vmatpush1.msra.mxu0 %v48
    %81 = vmatprep.subr.mxu0 0.0
    %82 = vmatpush1.msra.mxu0 0.0
    %83 = vmatprep.subr.mxu0 0.0
    %84 = vmatpush1.msra.mxu0 0.0
    %85 = vmatprep.subr.mxu0 0.0
    %86 = vmatpush1.msra.mxu0 0.0
    %87 = vmatprep.subr.mxu0 0.0
    %88 = vmatpush1.msra.mxu0 0.0
    %89 = vmatprep.subr.mxu0 0.0
    %90 = vmatpush1.msra.mxu0 0.0
    %91 = vmatprep.subr.mxu0 0.0
    %92 = vmatpush1.msra.mxu0 0.0
    %93 = vmatprep.subr.mxu0 0.0
    %94 = vmatpush1.msra.mxu0 0.0
    %95 = vmatprep.subr.mxu0 0.0
    %96 = vmatpush1.msra.mxu0 0.0
    %97 = vmatprep.subr.mxu0 0.0
    %98 = vmatpush1.msra.mxu0 0.0
    %99 = vmatprep.subr.mxu0 0.0
    %100 = vmatpush1.msra.mxu0 0.0
    %101 = vmatprep.subr.mxu0 0.0
    %102 = vmatpush1.msra.mxu0 0.0
    %103 = vmatprep.subr.mxu0 0.0
    %104 = vmatpush1.msra.mxu0 0.0
    %105 = vmatprep.subr.mxu0 0.0
    %106 = vmatpush1.msra.mxu0 0.0
    %107 = vmatprep.subr.mxu0 0.0
    %108 = vmatpush1.msra.mxu0 0.0
    %109 = vmatprep.subr.mxu0 0.0
    %110 = vmatpush1.msra.mxu0 0.0
    %111 = vmatprep.subr.mxu0 0.0
    %112 = vmatpush1.msra.mxu0 0.0
    %113 = vmatprep.mubr.f32.mxu0 0.0
    %114 = vmatmul.mubr.f32.gmra.mrb[0].mxu0 %v32
    %v115 = vpop.f32.mrb[0].mxu0
    %v116 = vadd.f32 0.0, %v115
    %v117 = vpop.f32.mrb[0].mxu0
    %118 = vdwg.mxu0
    %v119 = vld [vmem:[%s2] sm:$0x1]
    %v121 = vlaneseq
    %v122 = vshrl.u32 %v121, 7
    %v123 = vsub.s32 0, %v122
    %v124 = vrot.slane %v119, %v123
    %v126 = vmul.f32 %v116, %v124
    %v127 = vld [vmem:[%s3] sm:$0x1]
    %v129 = vlaneseq
    %v130 = vshrl.u32 %v129, 7
    %v131 = vsub.s32 0, %v130
    %v132 = vrot.slane %v127, %v131
    %v134 = vadd.f32 %v126, %v132
    %135 = vst [vmem:[#allocation5] sm:$0xff] %v134
    // Predicated region
    $region22: #{classification_adapter_forward.1} parent=1 // pred_check
      _
    $region23: #{classification_adapter_forward.1} parent=1 // pred_check_branch
      %137 = sbr.rel (0) target = $region25
    $region24: #{classification_adapter_forward.1} parent=1 // pred_region
      %s139 = ssub.s32 128, 128
      %140 = vsyncadd [#allocation4], %s139
      %s142 = sshll.u32 [#allocation5], 4
      %s143 = int_to_ptr.vmem [resolvable:$true] %s142
      %145 = dma.vmem_to_hbm [thread:$0]  %s143, 128, %s4, [#allocation4]
    $region25: #{classification_adapter_forward.1} parent=1 // pred_fallthru
      _
    // Predicated region
    $region26: #{classification_adapter_forward.1} parent=1 // pred_check
      _
    $region27: #{classification_adapter_forward.1} parent=1 // pred_check_branch
      %147 = sbr.rel (0) target = $region29
    $region28: #{classification_adapter_forward.1} parent=1 // pred_region
      %148 = dma.done [#allocation4], 128
    $region29: #{classification_adapter_forward.1} parent=1 // pred_fallthru
      _
    %149 = vsyncpa [#allocation3], 1
    %150 = vsyncpa [#allocation4], 1

</llo_original>
